<compile_context>
chip_gen: v6e
topology: v6e:2x2x1
jax: 0.10.0
libtpu: 0.0.40
codegen_flags: <defaults>
</compile_context>

<pallas_src>
import math

import jax
import jax.numpy as jnp
from jax.experimental import pallas as pl
from jax.experimental.pallas import tpu as pltpu


def _decoder_cell_kernel(trg_ref, prev_k_ref, ctx_ref, prev_ref,
                         wi_ref, wh_ref, wc_ref, b_ref, o_ref):
    """One (batch_tile, hidden_tile) block of the fused GRU-style cell."""
    mm_dt = wi_ref.dtype                       # bf16 weights -> bf16 MXU inputs
    trg = trg_ref[...].astype(mm_dt)           # (tb, E)
    prev_k = prev_k_ref[...].astype(mm_dt)     # (tb, H)  full hidden, contraction
    ctx = ctx_ref[...].astype(mm_dt)           # (tb, 2H)

    # Reset-gate pre-activation (f32 accumulation on the MXU).
    r = jnp.dot(trg, wi_ref[0], preferred_element_type=jnp.float32)
    r = r + jnp.dot(prev_k, wh_ref[0], preferred_element_type=jnp.float32)
    r = r + jnp.dot(ctx, wc_ref[0], preferred_element_type=jnp.float32)
    r = jax.nn.sigmoid(r + b_ref[0])           # (tb, th)

    # Candidate state pre-activation.
    c = jnp.dot(trg, wi_ref[1], preferred_element_type=jnp.float32)
    c = c + jnp.dot(prev_k, wh_ref[1], preferred_element_type=jnp.float32)
    c = c + jnp.dot(ctx, wc_ref[1], preferred_element_type=jnp.float32)
    c = jnp.tanh(c + b_ref[1])                 # (tb, th)

    prev_tile = prev_ref[...].astype(jnp.float32)          # (tb, th)
    out = (1.0 - r) * prev_tile + r * c
    o_ref[...] = out.astype(o_ref.dtype)


def _batch_tile(B):
    # Full batch when small (escape hatch of the (8,128) rule); otherwise
    # 128 rows (multiple of 8 sublanes).
    return B if B <= 128 else 128


def _hidden_tile(H):
    # Lane-dense output tile: full H when small, else a 256-wide multiple of
    # 128 (keeps the per-step weight slab 2*(E+3H)*256*4B well under the v7x
    # 64 MiB VMEM even with double buffering for typical decoder sizes).
    return H if H <= 256 else 256


def decoder_cell(trg_word, prev_s, ctx, packed_params):
    """trg_word: (B, E), prev_s: (B, H), ctx: (B, 2H).  Returns new prev_s (B, H)."""
    wi, wh, wc, b = packed_params              # (2,E,H), (2,H,H), (2,2H,H), (2,1,H)
    B, E = trg_word.shape
    H = prev_s.shape[1]
    assert ctx.shape == (B, 2 * H)
    assert wi.shape == (2, E, H) and wh.shape == (2, H, H)
    assert wc.shape == (2, 2 * H, H) and b.shape == (2, 1, H)

    tb = _batch_tile(B)
    th = _hidden_tile(H)
    grid = (pl.cdiv(B, tb), pl.cdiv(H, th))

    itemsize = jnp.dtype(trg_word.dtype).itemsize
    w_itemsize = jnp.dtype(wi.dtype).itemsize
    bytes_accessed = int(
        (trg_word.size + 2 * prev_s.size + ctx.size) * itemsize   # prev_s read twice
        + (wi.size + wh.size + wc.size) * w_itemsize
        + b.size * 4
        + B * H * itemsize)                                       # output
    cost = pl.CostEstimate(
        flops=int(2 * B * (E + 3 * H) * (2 * H)),
        transcendentals=int(3 * B * H),          # sigmoid (exp) + tanh
        bytes_accessed=bytes_accessed)

    out = pl.pallas_call(
        _decoder_cell_kernel,
        out_shape=jax.ShapeDtypeStruct((B, H), prev_s.dtype),
        grid_spec=pltpu.PrefetchScalarGridSpec(
            num_scalar_prefetch=0,
            grid=grid,
            in_specs=[
                # activations: stream batch tiles, keep contraction dims whole
                pl.BlockSpec((tb, E), lambda i, j: (i, 0)),          # trg_word
                pl.BlockSpec((tb, H), lambda i, j: (i, 0)),          # prev_s (matmul)
                pl.BlockSpec((tb, 2 * H), lambda i, j: (i, 0)),      # ctx
                pl.BlockSpec((tb, th), lambda i, j: (i, j)),         # prev_s (blend tile)
                # packed weights: column-tile follows the hidden grid axis
                pl.BlockSpec((2, E, th), lambda i, j: (0, 0, j)),    # Wi packed
                pl.BlockSpec((2, H, th), lambda i, j: (0, 0, j)),    # Wh packed
                pl.BlockSpec((2, 2 * H, th), lambda i, j: (0, 0, j)),# Wc packed
                pl.BlockSpec((2, 1, th), lambda i, j: (0, 0, j)),    # bias packed
            ],
            out_specs=pl.BlockSpec((tb, th), lambda i, j: (i, j)),
        ),
        compiler_params=pltpu.CompilerParams(
            dimension_semantics=("parallel", "parallel")),
        cost_estimate=cost,
    )(trg_word, prev_s, ctx, prev_s, wi, wh, wc, b)
    return out


# ----------------------------------------------------------------------------
# Parameter handling (one-time, outside the per-step hot path).
# ----------------------------------------------------------------------------

def init_decoder_cell_params(key, embed_dim, hidden_dim, dtype=jnp.float32):
    """PyTorch nn.Linear default init: U(-1/sqrt(fan_in), 1/sqrt(fan_in))."""
    E, H = embed_dim, hidden_dim
    keys = jax.random.split(key, 12)

    def linear(kw, kb, out_f, in_f):
        stdv = 1.0 / math.sqrt(in_f)
        w = jax.random.uniform(kw, (out_f, in_f), minval=-stdv, maxval=stdv,
                               dtype=dtype)
        bvec = jax.random.uniform(kb, (out_f,), minval=-stdv, maxval=stdv,
                                  dtype=dtype)
        return w, bvec

    return {
        "input_weights":  linear(keys[0], keys[1], 2 * H, E),
        "hidden_weights": linear(keys[2], keys[3], 2 * H, H),
        "ctx_weights":    linear(keys[4], keys[5], 2 * H, 2 * H),
        "input_in":       linear(keys[6], keys[7], H, E),
        "hidden_in":      linear(keys[8], keys[9], H, H),
        "ctx_in":         linear(keys[10], keys[11], H, 2 * H),
    }


def pack_decoder_cell_params(params, weight_dtype=None):
    """Pack/transpose weights ONCE into MXU-friendly (2, K, H) layout.

    Index 0 = reset-gate weights (rows :H of the *_weights matrices — the
    first chunk of gates.chunk(2, 1)), index 1 = candidate (*_in) weights.
    The update-gate half (rows H:) is dead code in the reference forward and
    is dropped; the output is unchanged.
    """
    w_iw, b_iw = params["input_weights"]
    w_hw, b_hw = params["hidden_weights"]
    w_cw, b_cw = params["ctx_weights"]
    w_ii, b_ii = params["input_in"]
    w_hi, b_hi = params["hidden_in"]
    w_ci, b_ci = params["ctx_in"]
    H = w_ii.shape[0]

    wi = jnp.stack([w_iw[:H].T, w_ii.T], axis=0)          # (2, E, H)
    wh = jnp.stack([w_hw[:H].T, w_hi.T], axis=0)          # (2, H, H)
    wc = jnp.stack([w_cw[:H].T, w_ci.T], axis=0)          # (2, 2H, H)
    b = jnp.stack([b_iw[:H] + b_hw[:H] + b_cw[:H],
                   b_ii + b_hi + b_ci], axis=0)[:, None, :].astype(jnp.float32)

    if weight_dtype is not None:                          # e.g. bf16 on v6e/v7x
        wi, wh, wc = (w.astype(weight_dtype) for w in (wi, wh, wc))
    return wi, wh, wc, b


# ----------------------------------------------------------------------------
# Pure-JAX reference (literal translation of the PyTorch forward).
# ----------------------------------------------------------------------------

def decoder_cell_reference(trg, prev_s, ctx, params):
    w_iw, b_iw = params["input_weights"]
    w_hw, b_hw = params["hidden_weights"]
    w_cw, b_cw = params["ctx_weights"]
    w_ii, b_ii = params["input_in"]
    w_hi, b_hi = params["hidden_in"]
    w_ci, b_ci = params["ctx_in"]
    H = prev_s.shape[1]

    gates = (trg @ w_iw.T + b_iw) + (prev_s @ w_hw.T + b_hw) + (ctx @ w_cw.T + b_cw)
    reset_gate = jax.nn.sigmoid(gates[:, :H])
    _update_gate = jax.nn.sigmoid(gates[:, H:])   # dead code in the original module
    prev_s_tilde = jnp.tanh((trg @ w_ii.T + b_ii) + (prev_s @ w_hi.T + b_hi)
                            + (ctx @ w_ci.T + b_ci))
    return (1.0 - reset_gate) * prev_s + reset_gate * prev_s_tilde


if __name__ == "__main__":
    key = jax.random.PRNGKey(0)
    k_t, k_s, k_c, k_p = jax.random.split(key, 4)

    B = 8            # batch
    E = 32           # embed_dim
    H = 128          # hidden_dim (lane-dense output: multiple of 128)

    trg_word = jax.random.normal(k_t, (B, E), dtype=jnp.float32)
    prev_s = jax.random.normal(k_s, (B, H), dtype=jnp.float32)
    ctx = jax.random.normal(k_c, (B, 2 * H), dtype=jnp.float32)

    params = init_decoder_cell_params(k_p, E, H)
    packed = pack_decoder_cell_params(params)     # one-time pack/transpose

    out = decoder_cell(trg_word, prev_s, ctx, packed)
    jax.block_until_ready(out)

    ref = decoder_cell_reference(trg_word, prev_s, ctx, params)
    assert out.shape == (B, H)
    assert jnp.allclose(out, ref, atol=1e-4, rtol=1e-4)

    print("KERNEL_OK")
</pallas_src>

<mosaic_0001>
module attributes {stable_mosaic.version = 11 : i64} {
  func.func @_decoder_cell_kernel(%arg0: i32, %arg1: i32, %arg2: memref<8x32xf32, #tpu.memory_space<vmem>>, %arg3: memref<8x128xf32, #tpu.memory_space<vmem>>, %arg4: memref<8x256xf32, #tpu.memory_space<vmem>>, %arg5: memref<8x128xf32, #tpu.memory_space<vmem>>, %arg6: memref<2x32x128xf32, #tpu.memory_space<vmem>>, %arg7: memref<2x128x128xf32, #tpu.memory_space<vmem>>, %arg8: memref<2x256x128xf32, #tpu.memory_space<vmem>>, %arg9: memref<2x1x128xf32, #tpu.memory_space<vmem>>, %arg10: memref<8x128xf32, #tpu.memory_space<vmem>>) attributes {dimension_semantics = [#tpu.dimension_semantics<parallel>, #tpu.dimension_semantics<parallel>], iteration_bounds = array<i64: 1, 1>, scalar_prefetch = 0 : i64, scratch_operands = 0 : i64, tpu.core_type = #tpu.core_type<tc>, window_params = [{transform_indices = @transform_0, window_bounds = array<i64: 8, 32>}, {transform_indices = @transform_1, window_bounds = array<i64: 8, 128>}, {transform_indices = @transform_2, window_bounds = array<i64: 8, 256>}, {transform_indices = @transform_3, window_bounds = array<i64: 8, 128>}, {transform_indices = @transform_4, window_bounds = array<i64: 2, 32, 128>}, {transform_indices = @transform_5, window_bounds = array<i64: 2, 128, 128>}, {transform_indices = @transform_6, window_bounds = array<i64: 2, 256, 128>}, {transform_indices = @transform_7, window_bounds = array<i64: 2, 1, 128>}, {transform_indices = @transform_8, window_bounds = array<i64: 8, 128>}]} {
    %c0 = arith.constant 0 : index
    %c0_0 = arith.constant 0 : index
    %0 = vector.load %arg2[%c0, %c0_0] : memref<8x32xf32, #tpu.memory_space<vmem>>, vector<8x32xf32>
    %c0_1 = arith.constant 0 : index
    %c0_2 = arith.constant 0 : index
    %1 = vector.load %arg3[%c0_1, %c0_2] : memref<8x128xf32, #tpu.memory_space<vmem>>, vector<8x128xf32>
    %c0_3 = arith.constant 0 : index
    %c0_4 = arith.constant 0 : index
    %2 = vector.load %arg4[%c0_3, %c0_4] : memref<8x256xf32, #tpu.memory_space<vmem>>, vector<8x256xf32>
    %c0_5 = arith.constant 0 : index
    %c0_6 = arith.constant 0 : index
    %c0_7 = arith.constant 0 : index
    %3 = vector.load %arg6[%c0_5, %c0_6, %c0_7] : memref<2x32x128xf32, #tpu.memory_space<vmem>>, vector<1x32x128xf32>
    %4 = vector.shape_cast %3 : vector<1x32x128xf32> to vector<32x128xf32>
    %cst = arith.constant dense<0.000000e+00> : vector<8x128xf32>
    %5 = tpu.matmul %0, %4, %cst {dimension_numbers = #tpu.dot_dimension_numbers<[1], [0], [0], [1], [0, 0, 1, 1], [], []>} : vector<8x32xf32>, vector<32x128xf32>, vector<8x128xf32> -> vector<8x128xf32>
    %c0_8 = arith.constant 0 : index
    %c0_9 = arith.constant 0 : index
    %c0_10 = arith.constant 0 : index
    %6 = vector.load %arg7[%c0_8, %c0_9, %c0_10] : memref<2x128x128xf32, #tpu.memory_space<vmem>>, vector<1x128x128xf32>
    %7 = vector.shape_cast %6 : vector<1x128x128xf32> to vector<128x128xf32>
    %cst_11 = arith.constant dense<0.000000e+00> : vector<8x128xf32>
    %8 = tpu.matmul %1, %7, %cst_11 {dimension_numbers = #tpu.dot_dimension_numbers<[1], [0], [0], [1], [0, 0, 1, 1], [], []>} : vector<8x128xf32>, vector<128x128xf32>, vector<8x128xf32> -> vector<8x128xf32>
    %9 = arith.addf %5, %8 : vector<8x128xf32>
    %c0_12 = arith.constant 0 : index
    %c0_13 = arith.constant 0 : index
    %c0_14 = arith.constant 0 : index
    %10 = vector.load %arg8[%c0_12, %c0_13, %c0_14] : memref<2x256x128xf32, #tpu.memory_space<vmem>>, vector<1x256x128xf32>
    %11 = vector.shape_cast %10 : vector<1x256x128xf32> to vector<256x128xf32>
    %cst_15 = arith.constant dense<0.000000e+00> : vector<8x128xf32>
    %12 = tpu.matmul %2, %11, %cst_15 {dimension_numbers = #tpu.dot_dimension_numbers<[1], [0], [0], [1], [0, 0, 1, 1], [], []>} : vector<8x256xf32>, vector<256x128xf32>, vector<8x128xf32> -> vector<8x128xf32>
    %13 = arith.addf %9, %12 : vector<8x128xf32>
    %c0_16 = arith.constant 0 : index
    %c0_17 = arith.constant 0 : index
    %c0_18 = arith.constant 0 : index
    %14 = vector.load %arg9[%c0_16, %c0_17, %c0_18] : memref<2x1x128xf32, #tpu.memory_space<vmem>>, vector<1x1x128xf32>
    %15 = vector.shape_cast %14 : vector<1x1x128xf32> to vector<1x128xf32>
    %16 = vector.broadcast %15 : vector<1x128xf32> to vector<8x128xf32>
    %17 = arith.addf %13, %16 : vector<8x128xf32>
    %18 = arith.negf %17 : vector<8x128xf32>
    %19 = math.exp %18 : vector<8x128xf32>
    %cst_19 = arith.constant 1.000000e+00 : f32
    %20 = vector.broadcast %cst_19 : f32 to vector<8x128xf32>
    %21 = arith.addf %20, %19 : vector<8x128xf32>
    %22 = arith.divf %20, %21 : vector<8x128xf32>
    %c1 = arith.constant 1 : index
    %c0_20 = arith.constant 0 : index
    %c0_21 = arith.constant 0 : index
    %23 = vector.load %arg6[%c1, %c0_20, %c0_21] : memref<2x32x128xf32, #tpu.memory_space<vmem>>, vector<1x32x128xf32>
    %24 = vector.shape_cast %23 : vector<1x32x128xf32> to vector<32x128xf32>
    %cst_22 = arith.constant dense<0.000000e+00> : vector<8x128xf32>
    %25 = tpu.matmul %0, %24, %cst_22 {dimension_numbers = #tpu.dot_dimension_numbers<[1], [0], [0], [1], [0, 0, 1, 1], [], []>} : vector<8x32xf32>, vector<32x128xf32>, vector<8x128xf32> -> vector<8x128xf32>
    %c1_23 = arith.constant 1 : index
    %c0_24 = arith.constant 0 : index
    %c0_25 = arith.constant 0 : index
    %26 = vector.load %arg7[%c1_23, %c0_24, %c0_25] : memref<2x128x128xf32, #tpu.memory_space<vmem>>, vector<1x128x128xf32>
    %27 = vector.shape_cast %26 : vector<1x128x128xf32> to vector<128x128xf32>
    %cst_26 = arith.constant dense<0.000000e+00> : vector<8x128xf32>
    %28 = tpu.matmul %1, %27, %cst_26 {dimension_numbers = #tpu.dot_dimension_numbers<[1], [0], [0], [1], [0, 0, 1, 1], [], []>} : vector<8x128xf32>, vector<128x128xf32>, vector<8x128xf32> -> vector<8x128xf32>
    %29 = arith.addf %25, %28 : vector<8x128xf32>
    %c1_27 = arith.constant 1 : index
    %c0_28 = arith.constant 0 : index
    %c0_29 = arith.constant 0 : index
    %30 = vector.load %arg8[%c1_27, %c0_28, %c0_29] : memref<2x256x128xf32, #tpu.memory_space<vmem>>, vector<1x256x128xf32>
    %31 = vector.shape_cast %30 : vector<1x256x128xf32> to vector<256x128xf32>
    %cst_30 = arith.constant dense<0.000000e+00> : vector<8x128xf32>
    %32 = tpu.matmul %2, %31, %cst_30 {dimension_numbers = #tpu.dot_dimension_numbers<[1], [0], [0], [1], [0, 0, 1, 1], [], []>} : vector<8x256xf32>, vector<256x128xf32>, vector<8x128xf32> -> vector<8x128xf32>
    %33 = arith.addf %29, %32 : vector<8x128xf32>
    %c1_31 = arith.constant 1 : index
    %c0_32 = arith.constant 0 : index
    %c0_33 = arith.constant 0 : index
    %34 = vector.load %arg9[%c1_31, %c0_32, %c0_33] : memref<2x1x128xf32, #tpu.memory_space<vmem>>, vector<1x1x128xf32>
    %35 = vector.shape_cast %34 : vector<1x1x128xf32> to vector<1x128xf32>
    %36 = vector.broadcast %35 : vector<1x128xf32> to vector<8x128xf32>
    %37 = arith.addf %33, %36 : vector<8x128xf32>
    %38 = math.tanh %37 : vector<8x128xf32>
    %c0_34 = arith.constant 0 : index
    %c0_35 = arith.constant 0 : index
    %39 = vector.load %arg5[%c0_34, %c0_35] : memref<8x128xf32, #tpu.memory_space<vmem>>, vector<8x128xf32>
    %cst_36 = arith.constant 1.000000e+00 : f32
    %40 = vector.broadcast %cst_36 : f32 to vector<8x128xf32>
    %41 = arith.subf %40, %22 : vector<8x128xf32>
    %42 = arith.mulf %41, %39 : vector<8x128xf32>
    %43 = arith.mulf %22, %38 : vector<8x128xf32>
    %44 = arith.addf %42, %43 : vector<8x128xf32>
    %c0_37 = arith.constant 0 : index
    %c0_38 = arith.constant 0 : index
    %45 = vector.load %arg10[%c0_37, %c0_38] : memref<8x128xf32, #tpu.memory_space<vmem>>, vector<8x128xf32>
    tpu.vector_store %arg10[%c0_37, %c0_38], %44 {strides = array<i32>} : memref<8x128xf32, #tpu.memory_space<vmem>>, vector<8x128xf32>,
    return
  }
  func.func @transform_0(%arg0: i32, %arg1: i32) -> (i32, i32) {
    %c0_i32 = arith.constant 0 : i32
    %c0_i32_0 = arith.constant 0 : i32
    return %arg0, %c0_i32 : i32, i32
  }
  func.func @transform_1(%arg0: i32, %arg1: i32) -> (i32, i32) {
    %c0_i32 = arith.constant 0 : i32
    %c0_i32_0 = arith.constant 0 : i32
    return %arg0, %c0_i32 : i32, i32
  }
  func.func @transform_2(%arg0: i32, %arg1: i32) -> (i32, i32) {
    %c0_i32 = arith.constant 0 : i32
    %c0_i32_0 = arith.constant 0 : i32
    return %arg0, %c0_i32 : i32, i32
  }
  func.func @transform_3(%arg0: i32, %arg1: i32) -> (i32, i32) {
    %c0_i32 = arith.constant 0 : i32
    return %arg0, %arg1 : i32, i32
  }
  func.func @transform_4(%arg0: i32, %arg1: i32) -> (i32, i32, i32) {
    %c0_i32 = arith.constant 0 : i32
    %c0_i32_0 = arith.constant 0 : i32
    %c0_i32_1 = arith.constant 0 : i32
    return %c0_i32, %c0_i32_0, %arg1 : i32, i32, i32
  }
  func.func @transform_5(%arg0: i32, %arg1: i32) -> (i32, i32, i32) {
    %c0_i32 = arith.constant 0 : i32
    %c0_i32_0 = arith.constant 0 : i32
    %c0_i32_1 = arith.constant 0 : i32
    return %c0_i32, %c0_i32_0, %arg1 : i32, i32, i32
  }
  func.func @transform_6(%arg0: i32, %arg1: i32) -> (i32, i32, i32) {
    %c0_i32 = arith.constant 0 : i32
    %c0_i32_0 = arith.constant 0 : i32
    %c0_i32_1 = arith.constant 0 : i32
    return %c0_i32, %c0_i32_0, %arg1 : i32, i32, i32
  }
  func.func @transform_7(%arg0: i32, %arg1: i32) -> (i32, i32, i32) {
    %c0_i32 = arith.constant 0 : i32
    %c0_i32_0 = arith.constant 0 : i32
    %c0_i32_1 = arith.constant 0 : i32
    return %c0_i32, %c0_i32_0, %arg1 : i32, i32, i32
  }
  func.func @transform_8(%arg0: i32, %arg1: i32) -> (i32, i32) {
    %c0_i32 = arith.constant 0 : i32
    return %arg0, %arg1 : i32, i32
  }
}

</mosaic_0001>

<llo_original>
// kernel: tpu_custom_call.1
$region0: #{tpu_custom_call.1}
  #allocation0 [shape = 'u32[]', space=smem, size = 0x4, offset = 0x4, fixed_abs, tag = 'smem constant byte address 0x4 - core index']
  #allocation1 [shape = 'u32[144,128]{1,0:T(1,128)}', space=vmem, size = 0x12000, scoped, tag = 'internal scratch']
  %s0 = inlined_call_operand.hbm [shape: f32[8,32], index: 0, kind: input, shape index: {}]
  %s1 = inlined_call_operand.hbm [shape: f32[8,128], index: 1, kind: input, shape index: {}]
  %s2 = inlined_call_operand.hbm [shape: f32[8,256], index: 2, kind: input, shape index: {}]
  %s3 = inlined_call_operand.hbm [shape: f32[8,128], index: 3, kind: input, shape index: {}]
  %s4 = inlined_call_operand.hbm [shape: f32[2,32,128], index: 4, kind: input, shape index: {}]
  %s5 = inlined_call_operand.hbm [shape: f32[2,128,128], index: 5, kind: input, shape index: {}]
  %s6 = inlined_call_operand.hbm [shape: f32[2,256,128], index: 6, kind: input, shape index: {}]
  %s7 = inlined_call_operand.vmem [shape: f32[2,1,128], index: 7, kind: input, shape index: {}]
  %s8 = inlined_call_operand.hbm [shape: f32[8,128], index: 8, kind: output, shape index: {}]
  %s9 = sld [smem:[#allocation0]]
  $region70: #{tpu_custom_call.1} parent=0
    _
  %s11 = ssub.s32 1, %s9
  %s12 = scalar_select 0, %s11, %s9
  $region1: #{tpu_custom_call.1} parent=0
    #allocation2 [shape = 'u8[4096]{0}', space=vmem, size = 0x1000, scoped, tag = 'input window, operand 0, single buffered']
    #allocation3 [shape = 's32[1]{0}', space=sflag, size = 0x4, scoped, tag = 'scoped memory for tpu_custom_call.1']
    #allocation4 [shape = 's32[1]{0}', space=sflag, size = 0x4, scoped, tag = 'scoped memory for tpu_custom_call.1']
    #allocation5 [shape = 'u8[4096]{0}', space=vmem, size = 0x1000, scoped, tag = 'input window, operand 1, single buffered']
    #allocation6 [shape = 's32[1]{0}', space=sflag, size = 0x4, scoped, tag = 'scoped memory for tpu_custom_call.1']
    #allocation7 [shape = 'u8[8192]{0}', space=vmem, size = 0x2000, scoped, tag = 'input window, operand 2, single buffered']
    #allocation8 [shape = 'u8[4096]{0}', space=vmem, size = 0x1000, scoped, tag = 'input window, operand 3, single buffered']
    #allocation9 [shape = 's32[1]{0}', space=sflag, size = 0x4, scoped, tag = 'scoped memory for tpu_custom_call.1']
    #allocation10 [shape = 'u8[32768]{0}', space=vmem, size = 0x8000, scoped, tag = 'input window, operand 4, single buffered']
    #allocation11 [shape = 'u8[131072]{0}', space=vmem, size = 0x20000, scoped, tag = 'input window, operand 5, single buffered']
    #allocation12 [shape = 's32[1]{0}', space=sflag, size = 0x4, scoped, tag = 'scoped memory for tpu_custom_call.1']
    #allocation13 [shape = 'u8[262144]{0}', space=vmem, size = 0x40000, scoped, tag = 'input window, operand 6, single buffered']
    #allocation14 [shape = 'u8[4096]{0}', space=vmem, size = 0x1000, scoped, tag = 'output window, operand 0, single buffered']
    %13 = vsyncpa [#allocation3], 0
    %14 = vsyncpa [#allocation6], 0
    %15 = vsyncpa [#allocation9], 0
    %16 = vsyncpa [#allocation12], 0
    %17 = vsyncpa [#allocation4], 0
    // Predicated region
    $region2: #{tpu_custom_call.1} parent=1 // pred_check
      _
    $region3: #{tpu_custom_call.1} parent=1 // pred_check_branch
      %19 = sbr.rel (0) target = $region5
    $region4: #{tpu_custom_call.1} parent=1 // pred_region
      %s21 = ssub.s32 128, 128
      %22 = vsyncadd [#allocation3], %s21
      %s24 = sshll.u32 [#allocation2], 4
      %s25 = int_to_ptr.vmem [resolvable:$true] %s24
      %27 = dma.hbm_to_vmem [thread:$0]  %s0, 128, %s25, [#allocation3]
    $region5: #{tpu_custom_call.1} parent=1 // pred_fallthru
      _
    // Predicated region
    $region6: #{tpu_custom_call.1} parent=1 // pred_check
      _
    $region7: #{tpu_custom_call.1} parent=1 // pred_check_branch
      %29 = sbr.rel (0) target = $region9
    $region8: #{tpu_custom_call.1} parent=1 // pred_region
      %s31 = ssub.s32 128, 128
      %32 = vsyncadd [#allocation6], %s31
      %s34 = sshll.u32 [#allocation5], 4
      %s35 = int_to_ptr.vmem [resolvable:$true] %s34
      %37 = dma.hbm_to_vmem [thread:$0]  %s1, 128, %s35, [#allocation6]
    $region9: #{tpu_custom_call.1} parent=1 // pred_fallthru
      _
    // Predicated region
    $region10: #{tpu_custom_call.1} parent=1 // pred_check
      _
    $region11: #{tpu_custom_call.1} parent=1 // pred_check_branch
      %39 = sbr.rel (0) target = $region13
    $region12: #{tpu_custom_call.1} parent=1 // pred_region
      %s41 = ssub.s32 256, 256
      %42 = vsyncadd [#allocation6], %s41
      %s44 = sshll.u32 [#allocation7], 4
      %s45 = int_to_ptr.vmem [resolvable:$true] %s44
      %47 = dma.hbm_to_vmem [thread:$0]  %s2, 256, %s45, [#allocation6]
    $region13: #{tpu_custom_call.1} parent=1 // pred_fallthru
      _
    // Predicated region
    $region14: #{tpu_custom_call.1} parent=1 // pred_check
      _
    $region15: #{tpu_custom_call.1} parent=1 // pred_check_branch
      %49 = sbr.rel (0) target = $region17
    $region16: #{tpu_custom_call.1} parent=1 // pred_region
      %s51 = ssub.s32 128, 128
      %52 = vsyncadd [#allocation9], %s51
      %s54 = sshll.u32 [#allocation8], 4
      %s55 = int_to_ptr.vmem [resolvable:$true] %s54
      %57 = dma.hbm_to_vmem [thread:$0]  %s3, 128, %s55, [#allocation9]
    $region17: #{tpu_custom_call.1} parent=1 // pred_fallthru
      _
    // Predicated region
    $region18: #{tpu_custom_call.1} parent=1 // pred_check
      _
    $region19: #{tpu_custom_call.1} parent=1 // pred_check_branch
      %59 = sbr.rel (0) target = $region21
    $region20: #{tpu_custom_call.1} parent=1 // pred_region
      %s61 = ssub.s32 1024, 1024
      %62 = vsyncadd [#allocation9], %s61
      %s63 = sshll.u32 [#allocation10], 4
      %s64 = int_to_ptr.vmem [resolvable:$true] %s63
      %69 = dma.hbm_to_vmem [thread:$0]  %s4, 1024, %s64, [#allocation9], 128, 128, 8
    $region21: #{tpu_custom_call.1} parent=1 // pred_fallthru
      _
    // Predicated region
    $region22: #{tpu_custom_call.1} parent=1 // pred_check
      _
    $region23: #{tpu_custom_call.1} parent=1 // pred_check_branch
      %71 = sbr.rel (0) target = $region25
    $region24: #{tpu_custom_call.1} parent=1 // pred_region
      %s73 = ssub.s32 4096, 4096
      %74 = vsyncadd [#allocation12], %s73
      %s75 = sshll.u32 [#allocation11], 4
      %s76 = int_to_ptr.vmem [resolvable:$true] %s75
      %81 = dma.hbm_to_vmem [thread:$0]  %s5, 4096, %s76, [#allocation12], 128, 128, 8
    $region25: #{tpu_custom_call.1} parent=1 // pred_fallthru
      _
    // Predicated region
    $region26: #{tpu_custom_call.1} parent=1 // pred_check
      _
    $region27: #{tpu_custom_call.1} parent=1 // pred_check_branch
      %83 = sbr.rel (0) target = $region29
    $region28: #{tpu_custom_call.1} parent=1 // pred_region
      %s85 = ssub.s32 8192, 8192
      %86 = vsyncadd [#allocation12], %s85
      %s87 = sshll.u32 [#allocation13], 4
      %s88 = int_to_ptr.vmem [resolvable:$true] %s87
      %93 = dma.hbm_to_vmem [thread:$0]  %s6, 8192, %s88, [#allocation12], 128, 128, 8
    $region29: #{tpu_custom_call.1} parent=1 // pred_fallthru
      _
    // Predicated region
    $region30: #{tpu_custom_call.1} parent=1 // pred_check
      _
    $region31: #{tpu_custom_call.1} parent=1 // pred_check_branch
      %95 = sbr.rel (0) target = $region33
    $region32: #{tpu_custom_call.1} parent=1 // pred_region
      _
    $region33: #{tpu_custom_call.1} parent=1 // pred_fallthru
      _
    // Predicated region
    $region34: #{tpu_custom_call.1} parent=1 // pred_check
      _
    $region35: #{tpu_custom_call.1} parent=1 // pred_check_branch
      %97 = sbr.rel (0) target = $region37
    $region36: #{tpu_custom_call.1} parent=1 // pred_region
      %98 = dma.done [#allocation3], 128
    $region37: #{tpu_custom_call.1} parent=1 // pred_fallthru
      _
    // Predicated region
    $region38: #{tpu_custom_call.1} parent=1 // pred_check
      _
    $region39: #{tpu_custom_call.1} parent=1 // pred_check_branch
      %100 = sbr.rel (0) target = $region41
    $region40: #{tpu_custom_call.1} parent=1 // pred_region
      %101 = dma.done [#allocation6], 128
    $region41: #{tpu_custom_call.1} parent=1 // pred_fallthru
      _
    // Predicated region
    $region42: #{tpu_custom_call.1} parent=1 // pred_check
      _
    $region43: #{tpu_custom_call.1} parent=1 // pred_check_branch
      %103 = sbr.rel (0) target = $region45
    $region44: #{tpu_custom_call.1} parent=1 // pred_region
      %104 = dma.done [#allocation6], 256
    $region45: #{tpu_custom_call.1} parent=1 // pred_fallthru
      _
    // Predicated region
    $region46: #{tpu_custom_call.1} parent=1 // pred_check
      _
    $region47: #{tpu_custom_call.1} parent=1 // pred_check_branch
      %106 = sbr.rel (0) target = $region49
    $region48: #{tpu_custom_call.1} parent=1 // pred_region
      %107 = dma.done [#allocation9], 128
    $region49: #{tpu_custom_call.1} parent=1 // pred_fallthru
      _
    // Predicated region
    $region50: #{tpu_custom_call.1} parent=1 // pred_check
      _
    $region51: #{tpu_custom_call.1} parent=1 // pred_check_branch
      %109 = sbr.rel (0) target = $region53
    $region52: #{tpu_custom_call.1} parent=1 // pred_region
      %110 = dma.done [#allocation9], 1024
    $region53: #{tpu_custom_call.1} parent=1 // pred_fallthru
      _
    // Predicated region
    $region54: #{tpu_custom_call.1} parent=1 // pred_check
      _
    $region55: #{tpu_custom_call.1} parent=1 // pred_check_branch
      %112 = sbr.rel (0) target = $region57
    $region56: #{tpu_custom_call.1} parent=1 // pred_region
      %113 = dma.done [#allocation12], 4096
    $region57: #{tpu_custom_call.1} parent=1 // pred_fallthru
      _
    // Predicated region
    $region58: #{tpu_custom_call.1} parent=1 // pred_check
      _
    $region59: #{tpu_custom_call.1} parent=1 // pred_check_branch
      %115 = sbr.rel (0) target = $region61
    $region60: #{tpu_custom_call.1} parent=1 // pred_region
      %116 = dma.done [#allocation12], 8192
    $region61: #{tpu_custom_call.1} parent=1 // pred_fallthru
      _
    %v117 = vld [vmem:[#allocation2] sm:$0xff]
    %v118 = vld [vmem:[#allocation5] sm:$0xff]
    %v119 = vld [vmem:[#allocation7] sm:$0xff]
    %v120 = vld [vmem:[#allocation7 + $0x8] sm:$0xff]
    %v121 = vld [vmem:[#allocation10] sm:$0xff]
    %v122 = vld [vmem:[#allocation10 + $0x8] sm:$0xff]
    %v123 = vld [vmem:[#allocation10 + $0x10] sm:$0xff]
    %v124 = vld [vmem:[#allocation10 + $0x18] sm:$0xff]
    %v125 = vld [vmem:[#allocation11] sm:$0xff]
    %v126 = vld [vmem:[#allocation11 + $0x8] sm:$0xff]
    %v127 = vld [vmem:[#allocation11 + $0x10] sm:$0xff]
    %v128 = vld [vmem:[#allocation11 + $0x18] sm:$0xff]
    %v129 = vld [vmem:[#allocation11 + $0x20] sm:$0xff]
    %v130 = vld [vmem:[#allocation11 + $0x28] sm:$0xff]
    %v131 = vld [vmem:[#allocation11 + $0x30] sm:$0xff]
    %v132 = vld [vmem:[#allocation11 + $0x38] sm:$0xff]
    %v133 = vld [vmem:[#allocation11 + $0x40] sm:$0xff]
    %v134 = vld [vmem:[#allocation11 + $0x48] sm:$0xff]
    %v135 = vld [vmem:[#allocation11 + $0x50] sm:$0xff]
    %v136 = vld [vmem:[#allocation11 + $0x58] sm:$0xff]
    %v137 = vld [vmem:[#allocation11 + $0x60] sm:$0xff]
    %v138 = vld [vmem:[#allocation11 + $0x68] sm:$0xff]
    %v139 = vld [vmem:[#allocation11 + $0x70] sm:$0xff]
    %v140 = vld [vmem:[#allocation11 + $0x78] sm:$0xff]
    %141 = vmatprep.subr.mxu0 0.0
    %142 = vmatpush1.msra.mxu0 %v140
    %143 = vmatprep.subr.mxu0 0.0
    %144 = vmatpush1.msra.mxu0 %v139
    %145 = vmatprep.subr.mxu0 0.0
    %146 = vmatpush1.msra.mxu0 %v138
    %147 = vmatprep.subr.mxu0 0.0
    %148 = vmatpush1.msra.mxu0 %v137
    %149 = vmatprep.subr.mxu0 0.0
    %150 = vmatpush1.msra.mxu0 %v136
    %151 = vmatprep.subr.mxu0 0.0
    %152 = vmatpush1.msra.mxu0 %v135
    %153 = vmatprep.subr.mxu0 0.0
    %154 = vmatpush1.msra.mxu0 %v134
    %155 = vmatprep.subr.mxu0 0.0
    %156 = vmatpush1.msra.mxu0 %v133
    %157 = vmatprep.subr.mxu0 0.0
    %158 = vmatpush1.msra.mxu0 %v132
    %159 = vmatprep.subr.mxu0 0.0
    %160 = vmatpush1.msra.mxu0 %v131
    %161 = vmatprep.subr.mxu0 0.0
    %162 = vmatpush1.msra.mxu0 %v130
    %163 = vmatprep.subr.mxu0 0.0
    %164 = vmatpush1.msra.mxu0 %v129
    %165 = vmatprep.subr.mxu0 0.0
    %166 = vmatpush1.msra.mxu0 %v128
    %167 = vmatprep.subr.mxu0 0.0
    %168 = vmatpush1.msra.mxu0 %v127
    %169 = vmatprep.subr.mxu0 0.0
    %170 = vmatpush1.msra.mxu0 %v126
    %171 = vmatprep.subr.mxu0 0.0
    %172 = vmatpush1.msra.mxu0 %v125
    %173 = vmatprep.subr.mxu0 0.0
    %174 = vmatpush2.msra.mxu0 0.0
    %175 = vmatprep.subr.mxu0 0.0
    %176 = vmatpush2.msra.mxu0 0.0
    %177 = vmatprep.subr.mxu0 0.0
    %178 = vmatpush2.msra.mxu0 0.0
    %179 = vmatprep.subr.mxu0 0.0
    %180 = vmatpush2.msra.mxu0 0.0
    %181 = vmatprep.subr.mxu0 0.0
    %182 = vmatpush2.msra.mxu0 0.0
    %183 = vmatprep.subr.mxu0 0.0
    %184 = vmatpush2.msra.mxu0 0.0
    %185 = vmatprep.subr.mxu0 0.0
    %186 = vmatpush2.msra.mxu0 0.0
    %187 = vmatprep.subr.mxu0 0.0
    %188 = vmatpush2.msra.mxu0 0.0
    %189 = vmatprep.subr.mxu0 0.0
    %190 = vmatpush2.msra.mxu0 0.0
    %191 = vmatprep.subr.mxu0 0.0
    %192 = vmatpush2.msra.mxu0 0.0
    %193 = vmatprep.subr.mxu0 0.0
    %194 = vmatpush2.msra.mxu0 0.0
    %195 = vmatprep.subr.mxu0 0.0
    %196 = vmatpush2.msra.mxu0 0.0
    %197 = vmatprep.subr.mxu0 0.0
    %198 = vmatpush2.msra.mxu0 0.0
    %199 = vmatprep.subr.mxu0 0.0
    %200 = vmatpush2.msra.mxu0 0.0
    %201 = vmatprep.subr.mxu0 0.0
    %202 = vmatpush2.msra.mxu0 0.0
    %203 = vmatprep.subr.mxu0 0.0
    %204 = vmatpush2.msra.mxu0 0.0
    %205 = vmatprep.mubr.f32.mxu0 0.0
    %206 = vmatmul.mubr.f32.gmra.mxu0 %v118
    %v207 = vpop.f32.mrf.mxu0
    %v208 = vadd.f32 0.0, %v207
    %v209 = vpop.f32.mrf.mxu0
    %210 = vdwg.mxu0
    %vm211 = vcmask 261120
    %v213 = vsel %vm211, %v117, 0
    %215 = vmatprep.subr.mxu0 0.0
    %216 = vmatpush1.msra.mxu0 0.0
    %217 = vmatprep.subr.mxu0 0.0
    %218 = vmatpush1.msra.mxu0 0.0
    %219 = vmatprep.subr.mxu0 0.0
    %220 = vmatpush1.msra.mxu0 0.0
    %221 = vmatprep.subr.mxu0 0.0
    %222 = vmatpush1.msra.mxu0 0.0
    %223 = vmatprep.subr.mxu0 0.0
    %224 = vmatpush1.msra.mxu0 0.0
    %225 = vmatprep.subr.mxu0 0.0
    %226 = vmatpush1.msra.mxu0 0.0
    %227 = vmatprep.subr.mxu0 0.0
    %228 = vmatpush1.msra.mxu0 0.0
    %229 = vmatprep.subr.mxu0 0.0
    %230 = vmatpush1.msra.mxu0 0.0
    %231 = vmatprep.subr.mxu0 0.0
    %232 = vmatpush1.msra.mxu0 0.0
    %233 = vmatprep.subr.mxu0 0.0
    %234 = vmatpush1.msra.mxu0 0.0
    %235 = vmatprep.subr.mxu0 0.0
    %236 = vmatpush1.msra.mxu0 0.0
    %237 = vmatprep.subr.mxu0 0.0
    %238 = vmatpush1.msra.mxu0 0.0
    %239 = vmatprep.subr.mxu0 0.0
    %240 = vmatpush1.msra.mxu0 %v124
    %241 = vmatprep.subr.mxu0 0.0
    %242 = vmatpush1.msra.mxu0 %v123
    %243 = vmatprep.subr.mxu0 0.0
    %244 = vmatpush1.msra.mxu0 %v122
    %245 = vmatprep.subr.mxu0 0.0
    %246 = vmatpush1.msra.mxu0 %v121
    %247 = vmatprep.subr.mxu0 0.0
    %248 = vmatpush2.msra.mxu0 0.0
    %249 = vmatprep.subr.mxu0 0.0
    %250 = vmatpush2.msra.mxu0 0.0
    %251 = vmatprep.subr.mxu0 0.0
    %252 = vmatpush2.msra.mxu0 0.0
    %253 = vmatprep.subr.mxu0 0.0
    %254 = vmatpush2.msra.mxu0 0.0
    %255 = vmatprep.subr.mxu0 0.0
    %256 = vmatpush2.msra.mxu0 0.0
    %257 = vmatprep.subr.mxu0 0.0
    %258 = vmatpush2.msra.mxu0 0.0
    %259 = vmatprep.subr.mxu0 0.0
    %260 = vmatpush2.msra.mxu0 0.0
    %261 = vmatprep.subr.mxu0 0.0
    %262 = vmatpush2.msra.mxu0 0.0
    %263 = vmatprep.subr.mxu0 0.0
    %264 = vmatpush2.msra.mxu0 0.0
    %265 = vmatprep.subr.mxu0 0.0
    %266 = vmatpush2.msra.mxu0 0.0
    %267 = vmatprep.subr.mxu0 0.0
    %268 = vmatpush2.msra.mxu0 0.0
    %269 = vmatprep.subr.mxu0 0.0
    %270 = vmatpush2.msra.mxu0 0.0
    %271 = vmatprep.subr.mxu0 0.0
    %272 = vmatpush2.msra.mxu0 0.0
    %273 = vmatprep.subr.mxu0 0.0
    %274 = vmatpush2.msra.mxu0 0.0
    %275 = vmatprep.subr.mxu0 0.0
    %276 = vmatpush2.msra.mxu0 0.0
    %277 = vmatprep.subr.mxu0 0.0
    %278 = vmatpush2.msra.mxu0 0.0
    %279 = vmatprep.mubr.f32.mxu0 0.0
    %280 = vmatmul.mubr.f32.gmra.mxu0 %v213
    %v281 = vpop.f32.mrf.mxu0
    %v282 = vadd.f32 %v208, %v281
    %v283 = vpop.f32.mrf.mxu0
    %284 = vdwg.mxu0
    %v285 = vld [vmem:[#allocation13] sm:$0xff]
    %v286 = vld [vmem:[#allocation13 + $0x8] sm:$0xff]
    %v287 = vld [vmem:[#allocation13 + $0x10] sm:$0xff]
    %v288 = vld [vmem:[#allocation13 + $0x18] sm:$0xff]
    %v289 = vld [vmem:[#allocation13 + $0x20] sm:$0xff]
    %v290 = vld [vmem:[#allocation13 + $0x28] sm:$0xff]
    %v291 = vld [vmem:[#allocation13 + $0x30] sm:$0xff]
    %v292 = vld [vmem:[#allocation13 + $0x38] sm:$0xff]
    %v293 = vld [vmem:[#allocation13 + $0x40] sm:$0xff]
    %v294 = vld [vmem:[#allocation13 + $0x48] sm:$0xff]
    %v295 = vld [vmem:[#allocation13 + $0x50] sm:$0xff]
    %v296 = vld [vmem:[#allocation13 + $0x58] sm:$0xff]
    %v297 = vld [vmem:[#allocation13 + $0x60] sm:$0xff]
    %v298 = vld [vmem:[#allocation13 + $0x68] sm:$0xff]
    %v299 = vld [vmem:[#allocation13 + $0x70] sm:$0xff]
    %v300 = vld [vmem:[#allocation13 + $0x78] sm:$0xff]
    %v301 = vld [vmem:[#allocation13 + $0x80] sm:$0xff]
    %v302 = vld [vmem:[#allocation13 + $0x88] sm:$0xff]
    %v303 = vld [vmem:[#allocation13 + $0x90] sm:$0xff]
    %v304 = vld [vmem:[#allocation13 + $0x98] sm:$0xff]
    %v305 = vld [vmem:[#allocation13 + $0xa0] sm:$0xff]
    %v306 = vld [vmem:[#allocation13 + $0xa8] sm:$0xff]
    %v307 = vld [vmem:[#allocation13 + $0xb0] sm:$0xff]
    %v308 = vld [vmem:[#allocation13 + $0xb8] sm:$0xff]
    %v309 = vld [vmem:[#allocation13 + $0xc0] sm:$0xff]
    %v310 = vld [vmem:[#allocation13 + $0xc8] sm:$0xff]
    %v311 = vld [vmem:[#allocation13 + $0xd0] sm:$0xff]
    %v312 = vld [vmem:[#allocation13 + $0xd8] sm:$0xff]
    %v313 = vld [vmem:[#allocation13 + $0xe0] sm:$0xff]
    %v314 = vld [vmem:[#allocation13 + $0xe8] sm:$0xff]
    %v315 = vld [vmem:[#allocation13 + $0xf0] sm:$0xff]
    %v316 = vld [vmem:[#allocation13 + $0xf8] sm:$0xff]
    %317 = vmatprep.subr.mxu0 0.0
    %318 = vmatpush1.msra.mxu0 %v300
    %319 = vmatprep.subr.mxu0 0.0
    %320 = vmatpush1.msra.mxu0 %v299
    %321 = vmatprep.subr.mxu0 0.0
    %322 = vmatpush1.msra.mxu0 %v298
    %323 = vmatprep.subr.mxu0 0.0
    %324 = vmatpush1.msra.mxu0 %v297
    %325 = vmatprep.subr.mxu0 0.0
    %326 = vmatpush1.msra.mxu0 %v296
    %327 = vmatprep.subr.mxu0 0.0
    %328 = vmatpush1.msra.mxu0 %v295
    %329 = vmatprep.subr.mxu0 0.0
    %330 = vmatpush1.msra.mxu0 %v294
    %331 = vmatprep.subr.mxu0 0.0
    %332 = vmatpush1.msra.mxu0 %v293
    %333 = vmatprep.subr.mxu0 0.0
    %334 = vmatpush1.msra.mxu0 %v292
    %335 = vmatprep.subr.mxu0 0.0
    %336 = vmatpush1.msra.mxu0 %v291
    %337 = vmatprep.subr.mxu0 0.0
    %338 = vmatpush1.msra.mxu0 %v290
    %339 = vmatprep.subr.mxu0 0.0
    %340 = vmatpush1.msra.mxu0 %v289
    %341 = vmatprep.subr.mxu0 0.0
    %342 = vmatpush1.msra.mxu0 %v288
    %343 = vmatprep.subr.mxu0 0.0
    %344 = vmatpush1.msra.mxu0 %v287
    %345 = vmatprep.subr.mxu0 0.0
    %346 = vmatpush1.msra.mxu0 %v286
    %347 = vmatprep.subr.mxu0 0.0
    %348 = vmatpush1.msra.mxu0 %v285
    %349 = vmatprep.subr.mxu0 0.0
    %350 = vmatpush2.msra.mxu0 %v316
    %351 = vmatprep.subr.mxu0 0.0
    %352 = vmatpush2.msra.mxu0 %v315
    %353 = vmatprep.subr.mxu0 0.0
    %354 = vmatpush2.msra.mxu0 %v314
    %355 = vmatprep.subr.mxu0 0.0
    %356 = vmatpush2.msra.mxu0 %v313
    %357 = vmatprep.subr.mxu0 0.0
    %358 = vmatpush2.msra.mxu0 %v312
    %359 = vmatprep.subr.mxu0 0.0
    %360 = vmatpush2.msra.mxu0 %v311
    %361 = vmatprep.subr.mxu0 0.0
    %362 = vmatpush2.msra.mxu0 %v310
    %363 = vmatprep.subr.mxu0 0.0
    %364 = vmatpush2.msra.mxu0 %v309
    %365 = vmatprep.subr.mxu0 0.0
    %366 = vmatpush2.msra.mxu0 %v308
    %367 = vmatprep.subr.mxu0 0.0
    %368 = vmatpush2.msra.mxu0 %v307
    %369 = vmatprep.subr.mxu0 0.0
    %370 = vmatpush2.msra.mxu0 %v306
    %371 = vmatprep.subr.mxu0 0.0
    %372 = vmatpush2.msra.mxu0 %v305
    %373 = vmatprep.subr.mxu0 0.0
    %374 = vmatpush2.msra.mxu0 %v304
    %375 = vmatprep.subr.mxu0 0.0
    %376 = vmatpush2.msra.mxu0 %v303
    %377 = vmatprep.subr.mxu0 0.0
    %378 = vmatpush2.msra.mxu0 %v302
    %379 = vmatprep.subr.mxu0 0.0
    %380 = vmatpush2.msra.mxu0 %v301
    %381 = vmatprep.mubr.f32.mxu0 %v120
    %382 = vmatmul.mubr.f32.gmra.mxu0 %v119
    %v383 = vpop.f32.mrf.mxu0
    %v384 = vadd.f32 0.0, %v383
    %v385 = vpop.f32.mrf.mxu0
    %386 = vdwg.mxu0
    %v387 = vadd.f32 %v282, %v384
    %v388 = vld [vmem:[%s7] sm:$0x1]
    %v390 = vlaneseq
    %v391 = vshrl.u32 %v390, 7
    %v392 = vsub.s32 0, %v391
    %v393 = vrot.slane %v388, %v392
    %v395 = vadd.f32 %v387, %v393
    %v396 = vxor.u32 %v395, 2147483648
    %v397 = vmul.f32 %v396, 1.442695
    %v398 = vpow.pop %v397
    %v399 = vadd.f32 %v398, 1.0
    %v400 = vrcp.pop %v399
    %v401 = vmul.f32 1.0, %v400
    %s402 = scalar_lea.vmem [#allocation10], 32
    %v403 = vld [vmem:[%s402] sm:$0xff]
    %v404 = vld [vmem:[%s402 + $0x8] sm:$0xff]
    %v405 = vld [vmem:[%s402 + $0x10] sm:$0xff]
    %v406 = vld [vmem:[%s402 + $0x18] sm:$0xff]
    %s407 = scalar_lea.vmem [#allocation11], 128
    %v408 = vld [vmem:[%s407] sm:$0xff]
    %v409 = vld [vmem:[%s407 + $0x8] sm:$0xff]
    %v410 = vld [vmem:[%s407 + $0x10] sm:$0xff]
    %v411 = vld [vmem:[%s407 + $0x18] sm:$0xff]
    %v412 = vld [vmem:[%s407 + $0x20] sm:$0xff]
    %v413 = vld [vmem:[%s407 + $0x28] sm:$0xff]
    %v414 = vld [vmem:[%s407 + $0x30] sm:$0xff]
    %v415 = vld [vmem:[%s407 + $0x38] sm:$0xff]
    %v416 = vld [vmem:[%s407 + $0x40] sm:$0xff]
    %v417 = vld [vmem:[%s407 + $0x48] sm:$0xff]
    %v418 = vld [vmem:[%s407 + $0x50] sm:$0xff]
    %v419 = vld [vmem:[%s407 + $0x58] sm:$0xff]
    %v420 = vld [vmem:[%s407 + $0x60] sm:$0xff]
    %v421 = vld [vmem:[%s407 + $0x68] sm:$0xff]
    %v422 = vld [vmem:[%s407 + $0x70] sm:$0xff]
    %v423 = vld [vmem:[%s407 + $0x78] sm:$0xff]
    %424 = vmatprep.subr.mxu0 0.0
    %425 = vmatpush1.msra.mxu0 %v423
    %426 = vmatprep.subr.mxu0 0.0
    %427 = vmatpush1.msra.mxu0 %v422
    %428 = vmatprep.subr.mxu0 0.0
    %429 = vmatpush1.msra.mxu0 %v421
    %430 = vmatprep.subr.mxu0 0.0
    %431 = vmatpush1.msra.mxu0 %v420
    %432 = vmatprep.subr.mxu0 0.0
    %433 = vmatpush1.msra.mxu0 %v419
    %434 = vmatprep.subr.mxu0 0.0
    %435 = vmatpush1.msra.mxu0 %v418
    %436 = vmatprep.subr.mxu0 0.0
    %437 = vmatpush1.msra.mxu0 %v417
    %438 = vmatprep.subr.mxu0 0.0
    %439 = vmatpush1.msra.mxu0 %v416
    %440 = vmatprep.subr.mxu0 0.0
    %441 = vmatpush1.msra.mxu0 %v415
    %442 = vmatprep.subr.mxu0 0.0
    %443 = vmatpush1.msra.mxu0 %v414
    %444 = vmatprep.subr.mxu0 0.0
    %445 = vmatpush1.msra.mxu0 %v413
    %446 = vmatprep.subr.mxu0 0.0
    %447 = vmatpush1.msra.mxu0 %v412
    %448 = vmatprep.subr.mxu0 0.0
    %449 = vmatpush1.msra.mxu0 %v411
    %450 = vmatprep.subr.mxu0 0.0
    %451 = vmatpush1.msra.mxu0 %v410
    %452 = vmatprep.subr.mxu0 0.0
    %453 = vmatpush1.msra.mxu0 %v409
    %454 = vmatprep.subr.mxu0 0.0
    %455 = vmatpush1.msra.mxu0 %v408
    %456 = vmatprep.subr.mxu0 0.0
    %457 = vmatpush2.msra.mxu0 0.0
    %458 = vmatprep.subr.mxu0 0.0
    %459 = vmatpush2.msra.mxu0 0.0
    %460 = vmatprep.subr.mxu0 0.0
    %461 = vmatpush2.msra.mxu0 0.0
    %462 = vmatprep.subr.mxu0 0.0
    %463 = vmatpush2.msra.mxu0 0.0
    %464 = vmatprep.subr.mxu0 0.0
    %465 = vmatpush2.msra.mxu0 0.0
    %466 = vmatprep.subr.mxu0 0.0
    %467 = vmatpush2.msra.mxu0 0.0
    %468 = vmatprep.subr.mxu0 0.0
    %469 = vmatpush2.msra.mxu0 0.0
    %470 = vmatprep.subr.mxu0 0.0
    %471 = vmatpush2.msra.mxu0 0.0
    %472 = vmatprep.subr.mxu0 0.0
    %473 = vmatpush2.msra.mxu0 0.0
    %474 = vmatprep.subr.mxu0 0.0
    %475 = vmatpush2.msra.mxu0 0.0
    %476 = vmatprep.subr.mxu0 0.0
    %477 = vmatpush2.msra.mxu0 0.0
    %478 = vmatprep.subr.mxu0 0.0
    %479 = vmatpush2.msra.mxu0 0.0
    %480 = vmatprep.subr.mxu0 0.0
    %481 = vmatpush2.msra.mxu0 0.0
    %482 = vmatprep.subr.mxu0 0.0
    %483 = vmatpush2.msra.mxu0 0.0
    %484 = vmatprep.subr.mxu0 0.0
    %485 = vmatpush2.msra.mxu0 0.0
    %486 = vmatprep.subr.mxu0 0.0
    %487 = vmatpush2.msra.mxu0 0.0
    %488 = vmatprep.mubr.f32.mxu0 0.0
    %489 = vmatmul.mubr.f32.gmra.mxu0 %v118
    %v490 = vpop.f32.mrf.mxu0
    %v491 = vadd.f32 0.0, %v490
    %v492 = vpop.f32.mrf.mxu0
    %493 = vdwg.mxu0
    %494 = vmatprep.subr.mxu0 0.0
    %495 = vmatpush1.msra.mxu0 0.0
    %496 = vmatprep.subr.mxu0 0.0
    %497 = vmatpush1.msra.mxu0 0.0
    %498 = vmatprep.subr.mxu0 0.0
    %499 = vmatpush1.msra.mxu0 0.0
    %500 = vmatprep.subr.mxu0 0.0
    %501 = vmatpush1.msra.mxu0 0.0
    %502 = vmatprep.subr.mxu0 0.0
    %503 = vmatpush1.msra.mxu0 0.0
    %504 = vmatprep.subr.mxu0 0.0
    %505 = vmatpush1.msra.mxu0 0.0
    %506 = vmatprep.subr.mxu0 0.0
    %507 = vmatpush1.msra.mxu0 0.0
    %508 = vmatprep.subr.mxu0 0.0
    %509 = vmatpush1.msra.mxu0 0.0
    %510 = vmatprep.subr.mxu0 0.0
    %511 = vmatpush1.msra.mxu0 0.0
    %512 = vmatprep.subr.mxu0 0.0
    %513 = vmatpush1.msra.mxu0 0.0
    %514 = vmatprep.subr.mxu0 0.0
    %515 = vmatpush1.msra.mxu0 0.0
    %516 = vmatprep.subr.mxu0 0.0
    %517 = vmatpush1.msra.mxu0 0.0
    %518 = vmatprep.subr.mxu0 0.0
    %519 = vmatpush1.msra.mxu0 %v406
    %520 = vmatprep.subr.mxu0 0.0
    %521 = vmatpush1.msra.mxu0 %v405
    %522 = vmatprep.subr.mxu0 0.0
    %523 = vmatpush1.msra.mxu0 %v404
    %524 = vmatprep.subr.mxu0 0.0
    %525 = vmatpush1.msra.mxu0 %v403
    %526 = vmatprep.subr.mxu0 0.0
    %527 = vmatpush2.msra.mxu0 0.0
    %528 = vmatprep.subr.mxu0 0.0
    %529 = vmatpush2.msra.mxu0 0.0
    %530 = vmatprep.subr.mxu0 0.0
    %531 = vmatpush2.msra.mxu0 0.0
    %532 = vmatprep.subr.mxu0 0.0
    %533 = vmatpush2.msra.mxu0 0.0
    %534 = vmatprep.subr.mxu0 0.0
    %535 = vmatpush2.msra.mxu0 0.0
    %536 = vmatprep.subr.mxu0 0.0
    %537 = vmatpush2.msra.mxu0 0.0
    %538 = vmatprep.subr.mxu0 0.0
    %539 = vmatpush2.msra.mxu0 0.0
    %540 = vmatprep.subr.mxu0 0.0
    %541 = vmatpush2.msra.mxu0 0.0
    %542 = vmatprep.subr.mxu0 0.0
    %543 = vmatpush2.msra.mxu0 0.0
    %544 = vmatprep.subr.mxu0 0.0
    %545 = vmatpush2.msra.mxu0 0.0
    %546 = vmatprep.subr.mxu0 0.0
    %547 = vmatpush2.msra.mxu0 0.0
    %548 = vmatprep.subr.mxu0 0.0
    %549 = vmatpush2.msra.mxu0 0.0
    %550 = vmatprep.subr.mxu0 0.0
    %551 = vmatpush2.msra.mxu0 0.0
    %552 = vmatprep.subr.mxu0 0.0
    %553 = vmatpush2.msra.mxu0 0.0
    %554 = vmatprep.subr.mxu0 0.0
    %555 = vmatpush2.msra.mxu0 0.0
    %556 = vmatprep.subr.mxu0 0.0
    %557 = vmatpush2.msra.mxu0 0.0
    %558 = vmatprep.mubr.f32.mxu0 0.0
    %559 = vmatmul.mubr.f32.gmra.mxu0 %v213
    %v560 = vpop.f32.mrf.mxu0
    %v561 = vadd.f32 %v491, %v560
    %v562 = vpop.f32.mrf.mxu0
    %563 = vdwg.mxu0
    %s564 = scalar_lea.vmem [#allocation13], 256
    %v565 = vld [vmem:[%s564] sm:$0xff]
    %v566 = vld [vmem:[%s564 + $0x8] sm:$0xff]
    %v567 = vld [vmem:[%s564 + $0x10] sm:$0xff]
    %v568 = vld [vmem:[%s564 + $0x18] sm:$0xff]
    %v569 = vld [vmem:[%s564 + $0x20] sm:$0xff]
    %v570 = vld [vmem:[%s564 + $0x28] sm:$0xff]
    %v571 = vld [vmem:[%s564 + $0x30] sm:$0xff]
    %v572 = vld [vmem:[%s564 + $0x38] sm:$0xff]
    %v573 = vld [vmem:[%s564 + $0x40] sm:$0xff]
    %v574 = vld [vmem:[%s564 + $0x48] sm:$0xff]
    %v575 = vld [vmem:[%s564 + $0x50] sm:$0xff]
    %v576 = vld [vmem:[%s564 + $0x58] sm:$0xff]
    %v577 = vld [vmem:[%s564 + $0x60] sm:$0xff]
    %v578 = vld [vmem:[%s564 + $0x68] sm:$0xff]
    %v579 = vld [vmem:[%s564 + $0x70] sm:$0xff]
    %v580 = vld [vmem:[%s564 + $0x78] sm:$0xff]
    %v581 = vld [vmem:[%s564 + $0x80] sm:$0xff]
    %v582 = vld [vmem:[%s564 + $0x88] sm:$0xff]
    %v583 = vld [vmem:[%s564 + $0x90] sm:$0xff]
    %v584 = vld [vmem:[%s564 + $0x98] sm:$0xff]
    %v585 = vld [vmem:[%s564 + $0xa0] sm:$0xff]
    %v586 = vld [vmem:[%s564 + $0xa8] sm:$0xff]
    %v587 = vld [vmem:[%s564 + $0xb0] sm:$0xff]
    %v588 = vld [vmem:[%s564 + $0xb8] sm:$0xff]
    %v589 = vld [vmem:[%s564 + $0xc0] sm:$0xff]
    %v590 = vld [vmem:[%s564 + $0xc8] sm:$0xff]
    %v591 = vld [vmem:[%s564 + $0xd0] sm:$0xff]
    %v592 = vld [vmem:[%s564 + $0xd8] sm:$0xff]
    %v593 = vld [vmem:[%s564 + $0xe0] sm:$0xff]
    %v594 = vld [vmem:[%s564 + $0xe8] sm:$0xff]
    %v595 = vld [vmem:[%s564 + $0xf0] sm:$0xff]
    %v596 = vld [vmem:[%s564 + $0xf8] sm:$0xff]
    %597 = vmatprep.subr.mxu0 0.0
    %598 = vmatpush1.msra.mxu0 %v580
    %599 = vmatprep.subr.mxu0 0.0
    %600 = vmatpush1.msra.mxu0 %v579
    %601 = vmatprep.subr.mxu0 0.0
    %602 = vmatpush1.msra.mxu0 %v578
    %603 = vmatprep.subr.mxu0 0.0
    %604 = vmatpush1.msra.mxu0 %v577
    %605 = vmatprep.subr.mxu0 0.0
    %606 = vmatpush1.msra.mxu0 %v576
    %607 = vmatprep.subr.mxu0 0.0
    %608 = vmatpush1.msra.mxu0 %v575
    %609 = vmatprep.subr.mxu0 0.0
    %610 = vmatpush1.msra.mxu0 %v574
    %611 = vmatprep.subr.mxu0 0.0
    %612 = vmatpush1.msra.mxu0 %v573
    %613 = vmatprep.subr.mxu0 0.0
    %614 = vmatpush1.msra.mxu0 %v572
    %615 = vmatprep.subr.mxu0 0.0
    %616 = vmatpush1.msra.mxu0 %v571
    %617 = vmatprep.subr.mxu0 0.0
    %618 = vmatpush1.msra.mxu0 %v570
    %619 = vmatprep.subr.mxu0 0.0
    %620 = vmatpush1.msra.mxu0 %v569
    %621 = vmatprep.subr.mxu0 0.0
    %622 = vmatpush1.msra.mxu0 %v568
    %623 = vmatprep.subr.mxu0 0.0
    %624 = vmatpush1.msra.mxu0 %v567
    %625 = vmatprep.subr.mxu0 0.0
    %626 = vmatpush1.msra.mxu0 %v566
    %627 = vmatprep.subr.mxu0 0.0
    %628 = vmatpush1.msra.mxu0 %v565
    %629 = vmatprep.subr.mxu0 0.0
    %630 = vmatpush2.msra.mxu0 %v596
    %631 = vmatprep.subr.mxu0 0.0
    %632 = vmatpush2.msra.mxu0 %v595
    %633 = vmatprep.subr.mxu0 0.0
    %634 = vmatpush2.msra.mxu0 %v594
    %635 = vmatprep.subr.mxu0 0.0
    %636 = vmatpush2.msra.mxu0 %v593
    %637 = vmatprep.subr.mxu0 0.0
    %638 = vmatpush2.msra.mxu0 %v592
    %639 = vmatprep.subr.mxu0 0.0
    %640 = vmatpush2.msra.mxu0 %v591
    %641 = vmatprep.subr.mxu0 0.0
    %642 = vmatpush2.msra.mxu0 %v590
    %643 = vmatprep.subr.mxu0 0.0
    %644 = vmatpush2.msra.mxu0 %v589
    %645 = vmatprep.subr.mxu0 0.0
    %646 = vmatpush2.msra.mxu0 %v588
    %647 = vmatprep.subr.mxu0 0.0
    %648 = vmatpush2.msra.mxu0 %v587
    %649 = vmatprep.subr.mxu0 0.0
    %650 = vmatpush2.msra.mxu0 %v586
    %651 = vmatprep.subr.mxu0 0.0
    %652 = vmatpush2.msra.mxu0 %v585
    %653 = vmatprep.subr.mxu0 0.0
    %654 = vmatpush2.msra.mxu0 %v584
    %655 = vmatprep.subr.mxu0 0.0
    %656 = vmatpush2.msra.mxu0 %v583
    %657 = vmatprep.subr.mxu0 0.0
    %658 = vmatpush2.msra.mxu0 %v582
    %659 = vmatprep.subr.mxu0 0.0
    %660 = vmatpush2.msra.mxu0 %v581
    %661 = vmatprep.mubr.f32.mxu0 %v120
    %662 = vmatmul.mubr.f32.gmra.mxu0 %v119
    %v663 = vpop.f32.mrf.mxu0
    %v664 = vadd.f32 0.0, %v663
    %v665 = vpop.f32.mrf.mxu0
    %666 = vdwg.mxu0
    %v667 = vadd.f32 %v561, %v664
    %s668 = scalar_lea.vmem %s7, 1
    %v669 = vld [vmem:[%s668] sm:$0x1]
    %v671 = vlaneseq
    %v672 = vshrl.u32 %v671, 7
    %v673 = vsub.s32 0, %v672
    %v674 = vrot.slane %v669, %v673
    %v676 = vadd.f32 %v667, %v674
    %v677 = vtanh.pop %v676
    %v678 = vld [vmem:[#allocation8] sm:$0xff]
    %v679 = vsub.f32 1.0, %v401
    %v680 = vmul.f32 %v679, %v678
    %v681 = vmul.f32 %v401, %v677
    %v682 = vadd.f32 %v680, %v681
    %683 = vst [vmem:[#allocation14] sm:$0xff] %v682
    // Predicated region
    $region62: #{tpu_custom_call.1} parent=1 // pred_check
      _
    $region63: #{tpu_custom_call.1} parent=1 // pred_check_branch
      %685 = sbr.rel (0) target = $region65
    $region64: #{tpu_custom_call.1} parent=1 // pred_region
      %s687 = ssub.s32 128, 128
      %688 = vsyncadd [#allocation4], %s687
      %s690 = sshll.u32 [#allocation14], 4
      %s691 = int_to_ptr.vmem [resolvable:$true] %s690
      %693 = dma.vmem_to_hbm [thread:$0]  %s691, 128, %s8, [#allocation4]
    $region65: #{tpu_custom_call.1} parent=1 // pred_fallthru
      _
    // Predicated region
    $region66: #{tpu_custom_call.1} parent=1 // pred_check
      _
    $region67: #{tpu_custom_call.1} parent=1 // pred_check_branch
      %695 = sbr.rel (0) target = $region69
    $region68: #{tpu_custom_call.1} parent=1 // pred_region
      %696 = dma.done [#allocation4], 128
    $region69: #{tpu_custom_call.1} parent=1 // pred_fallthru
      _
    %697 = vsyncpa [#allocation3], 1
    %698 = vsyncpa [#allocation6], 1
    %699 = vsyncpa [#allocation9], 1
    %700 = vsyncpa [#allocation12], 1
    %701 = vsyncpa [#allocation4], 1

</llo_original>
